<compile_context>
chip_gen: v6e
topology: v6e:2x2x1
jax: 0.10.0
libtpu: 0.0.40
codegen_flags: <defaults>
</compile_context>

<pallas_src>
from functools import partial

import jax
import jax.numpy as jnp
from jax.experimental import pallas as pl
from jax.experimental.pallas import tpu as pltpu


def _nnz_kernel(x_ref, partial_ref):
    # Per-block nonzero count, reduced over the sublane axis but kept per-lane
    # so the output row is a single lane-dense (1, 128) int32 store.
    nz = (x_ref[...] != 0).astype(jnp.int32)
    partial_ref[...] = jnp.sum(nz, axis=0, keepdims=True)


def _round_up(n, m):
    return ((n + m - 1) // m) * m


@partial(jax.jit, static_argnames=())
def _sparsity(x):
    """Sparsity (1 - nnz/numel) of `x`, computed with a single-pass Pallas kernel."""
    total = x.size
    dtype = x.dtype
    lanes = 128

    # Dtype-aware sublane multiple: 8 for 4-byte, 16 for 2-byte, 32 for 1-byte.
    itemsize = jnp.dtype(dtype).itemsize
    sub = max(8, 32 // itemsize)

    rows_raw = pl.cdiv(total, lanes)

    # Big tiles to amortize per-step overhead; 8192 rows * 128 lanes * 4 B =
    # 4 MiB per f32 tile -> ~8 MiB double-buffered input.
    max_tile_rows = 8192  # multiple of 8, 16 and 32
    if rows_raw <= max_tile_rows:
        tile_rows = _round_up(rows_raw, sub)
    else:
        tile_rows = max_tile_rows

    padded_rows = _round_up(rows_raw, tile_rows)
    num_blocks = padded_rows // tile_rows

    # Flatten (free bitcast) and zero-pad only when needed so the flat view is
    # exactly (padded_rows, 128).  Zero padding is count-neutral.
    flat = x.reshape(-1)
    pad = padded_rows * lanes - total
    if pad:
        flat = jnp.concatenate([flat, jnp.zeros((pad,), dtype=dtype)])
    x2d = flat.reshape(padded_rows, lanes)

    partials = pl.pallas_call(
        _nnz_kernel,
        out_shape=jax.ShapeDtypeStruct((num_blocks, lanes), jnp.int32),
        grid_spec=pltpu.PrefetchScalarGridSpec(
            num_scalar_prefetch=0,
            grid=(num_blocks,),
            in_specs=[pl.BlockSpec((tile_rows, lanes), lambda i: (i, 0))],
            out_specs=pl.BlockSpec((1, lanes), lambda i: (i, 0)),
        ),
        compiler_params=pltpu.CompilerParams(
            dimension_semantics=("parallel",)
        ),
    )(x2d)

    # Final reduce of the tiny (num_blocks, 128) partials happens in XLA.
    # NOTE: int32 count; for tensors with > 2^31 nonzeros switch to an
    # int64-safe reduction here.
    cnt = jnp.sum(partials)
    return 1.0 - cnt.astype(jnp.float32) / jnp.float32(total)


def save_output_forward(x, bias, filt):
    """Returns (clone_of_x, sparsity_scalar).

    bias/filt are unused in the forward pass (they only participate in the
    custom backward of the PyTorch module)."""
    del bias, filt
    # The "clone": JAX arrays are immutable, so returning x already has clone
    # semantics and avoids a redundant HBM read+write.
    return x, _sparsity(x)


if __name__ == "__main__":
    key = jax.random.PRNGKey(0)
    k_x, k_b, k_f, k_mask = jax.random.split(key, 4)

    # NCHW input, small shapes: batch=2, channels=4, spatial=16.
    x = jax.random.normal(k_x, (2, 4, 16, 16), dtype=jnp.float32)
    # Introduce some zeros so the sparsity reduction is non-trivial.
    mask = jax.random.bernoulli(k_mask, p=0.7, shape=x.shape)
    x = jnp.where(mask, x, 0.0)

    # Deterministic parameter init (shapes from the module's __init__).
    bias = jax.random.normal(k_b, (1, 1), dtype=jnp.float32)
    filt = jax.random.normal(k_f, (1, 1), dtype=jnp.float32)

    out, sparsity = save_output_forward(x, bias, filt)
    out = jax.block_until_ready(out)
    sparsity = jax.block_until_ready(sparsity)

    # Verify: output matches the input (clone semantics), sparsity matches ref.
    ref_sparsity = 1.0 - float(jnp.count_nonzero(x)) / float(x.size)
    assert out.shape == x.shape and out.dtype == x.dtype
    assert bool(jnp.all(out == x))
    assert abs(float(sparsity) - ref_sparsity) < 1e-6

    # Secondary check: irregular size exercises the zero-pad path.
    y = jnp.where(
        jax.random.bernoulli(k_mask, p=0.5, shape=(3, 5, 7)),
        jax.random.normal(k_x, (3, 5, 7), dtype=jnp.float32),
        0.0,
    )
    _, sp_y = save_output_forward(y, bias, filt)
    sp_y = jax.block_until_ready(sp_y)
    ref_sp_y = 1.0 - float(jnp.count_nonzero(y)) / float(y.size)
    assert abs(float(sp_y) - ref_sp_y) < 1e-6

    print("KERNEL_OK")
</pallas_src>

<mosaic_0001>
module attributes {stable_mosaic.version = 11 : i64} {
  func.func @_nnz_kernel(%arg0: i32, %arg1: memref<16x128xf32, #tpu.memory_space<vmem>>, %arg2: memref<1x128xi32, #tpu.memory_space<vmem>>) attributes {dimension_semantics = [#tpu.dimension_semantics<parallel>], iteration_bounds = array<i64: 1>, scalar_prefetch = 0 : i64, scratch_operands = 0 : i64, tpu.core_type = #tpu.core_type<tc>, window_params = [{transform_indices = @transform_0, window_bounds = array<i64: 16, 128>}, {transform_indices = @transform_1, window_bounds = array<i64: 1, 128>}]} {
    %c0 = arith.constant 0 : index
    %c0_0 = arith.constant 0 : index
    %0 = vector.load %arg1[%c0, %c0_0] : memref<16x128xf32, #tpu.memory_space<vmem>>, vector<16x128xf32>
    %cst = arith.constant 0.000000e+00 : f32
    %1 = vector.broadcast %cst : f32 to vector<16x128xf32>
    %2 = arith.cmpf one, %0, %1 : vector<16x128xf32>
    %3 = arith.extui %2 : vector<16x128xi1> to vector<16x128xi32>
    %cst_1 = arith.constant dense<0> : vector<128xi32>
    %4 = vector.multi_reduction <add>, %3, %cst_1 [0] : vector<16x128xi32> to vector<128xi32>
    %5 = vector.shape_cast %4 : vector<128xi32> to vector<1x128xi32>
    %c0_2 = arith.constant 0 : index
    %c0_3 = arith.constant 0 : index
    %6 = vector.load %arg2[%c0_2, %c0_3] : memref<1x128xi32, #tpu.memory_space<vmem>>, vector<1x128xi32>
    tpu.vector_store %arg2[%c0_2, %c0_3], %5 {strides = array<i32>} : memref<1x128xi32, #tpu.memory_space<vmem>>, vector<1x128xi32>,
    return
  }
  func.func @transform_0(%arg0: i32) -> (i32, i32) {
    %c0_i32 = arith.constant 0 : i32
    %c0_i32_0 = arith.constant 0 : i32
    return %arg0, %c0_i32 : i32, i32
  }
  func.func @transform_1(%arg0: i32) -> (i32, i32) {
    %c0_i32 = arith.constant 0 : i32
    %c0_i32_0 = arith.constant 0 : i32
    return %arg0, %c0_i32 : i32, i32
  }
}

</mosaic_0001>

<llo_original>
// kernel: _sparsity.1
$region0: #{_sparsity.1}
  #allocation0 [shape = 'u32[]', space=smem, size = 0x4, offset = 0x4, fixed_abs, tag = 'smem constant byte address 0x4 - core index']
  #allocation1 [shape = 'u32[144,128]{1,0:T(1,128)}', space=vmem, size = 0x12000, scoped, tag = 'internal scratch']
  %s0 = inlined_call_operand.vmem [shape: f32[16,128], index: 0, kind: input, shape index: {}]
  %s1 = inlined_call_operand.vmem [shape: s32[1,128], index: 1, kind: output, shape index: {}]
  %s2 = sld [smem:[#allocation0]]
  $region14: #{_sparsity.1} parent=0
    _
  %s4 = ssub.s32 1, %s2
  %s5 = scalar_select 0, %s4, %s2
  // Predicated region
  $region2: #{_sparsity.1} parent=0 // pred_check
    _
  $region3: #{_sparsity.1} parent=0 // pred_check_branch
    %7 = sbr.rel (0) target = $region5
  $region4: #{_sparsity.1} parent=0 // pred_region
    _
  $region5: #{_sparsity.1} parent=0 // pred_fallthru
    _
  %v8 = vld [vmem:[%s0] sm:$0xff]
  %v9 = vld [vmem:[%s0 + $0x8] sm:$0xff]
  %vm10 = vcmp.ne.f32.partialorder %v8, 0.0
  %vm11 = vcmp.ne.f32.partialorder %v9, 0.0
  %v12 = vsel %vm10, 1, 0
  %v13 = vsel %vm11, 1, 0
  %v14 = vadd.s32 %v12, %v13
  %v15 = vrot.slane %v14, 4
  %v16 = vadd.s32 %v14, %v15
  %v17 = vrot.slane %v16, 2
  %v18 = vadd.s32 %v16, %v17
  %v19 = vrot.slane %v18, 1
  %v20 = vadd.s32 %v18, %v19
  %21 = vst [vmem:[%s1] sm:$0x1] %v20
  // Predicated region
  $region6: #{_sparsity.1} parent=0 // pred_check
    _
  $region7: #{_sparsity.1} parent=0 // pred_check_branch
    %23 = sbr.rel (0) target = $region9
  $region8: #{_sparsity.1} parent=0 // pred_region
    _
  $region9: #{_sparsity.1} parent=0 // pred_fallthru
    _
  // Predicated region
  $region10: #{_sparsity.1} parent=0 // pred_check
    _
  $region11: #{_sparsity.1} parent=0 // pred_check_branch
    %25 = sbr.rel (0) target = $region13
  $region12: #{_sparsity.1} parent=0 // pred_region
    _
  $region13: #{_sparsity.1} parent=0 // pred_fallthru
    _

</llo_original>
